<compile_context>
chip_gen: v7x
topology: tpu7x:2x2x1
jax: 0.10.0
libtpu: 0.0.40
codegen_flags: <defaults>
</compile_context>

<pallas_src>
import functools
import math

import jax
import jax.numpy as jnp
from jax.experimental import pallas as pl
from jax.experimental.pallas import tpu as pltpu


# --------------------------------------------------------------------------- #
# Kernels
# --------------------------------------------------------------------------- #
def _sub_mean_kernel(x_ref, o_ref, *, inv_hw):
    # Read #1: f32-accumulated row sum taken directly from the ref, so no f32
    # copy of the whole tile stays live across both the reduction and subtract.
    row_sum = jnp.sum(x_ref[...], axis=-1, keepdims=True, dtype=jnp.float32)
    mean = (row_sum * inv_hw).astype(o_ref.dtype)
    # Read #2: subtract in the input dtype.
    o_ref[...] = x_ref[...] - mean


def _sub_mean_seg_kernel(x_ref, s_ref, st_ref, o_ref, *, inv_hw):
    # x_ref: (r_tile, G*hw). s_ref: (G*hw, G) 0/1 segment matrix, st_ref: its
    # transpose.  Segment sums + mean broadcast run on the otherwise-idle MXU so
    # loads AND stores stay lane-dense (no masked vst for 7x7/14x14 maps).
    seg_sum = jnp.dot(x_ref[...], s_ref[...],
                      preferred_element_type=jnp.float32)        # (r_tile, G) f32
    mean = (seg_sum * inv_hw).astype(o_ref.dtype)
    bmean = jnp.dot(mean, st_ref[...],
                    preferred_element_type=jnp.float32).astype(o_ref.dtype)
    o_ref[...] = x_ref[...] - bmean


def _row_sum_kernel(x_ref, sum_ref, *, hw, hw_tile, need_mask):
    # Accumulate f32 row sums directly in the resident output block.
    @pl.when(pl.program_id(1) == 0)
    def _():
        sum_ref[...] = jnp.zeros_like(sum_ref)

    x = x_ref[...]
    if need_mask:  # last hw block is padded with garbage -> mask it out
        col = (jax.lax.broadcasted_iota(jnp.int32, x.shape, 1)
               + pl.program_id(1) * hw_tile)
        x = jnp.where(col < hw, x, jnp.zeros_like(x))
    sum_ref[...] += jnp.sum(x, axis=-1, keepdims=True, dtype=jnp.float32)


def _sub_bcast_kernel(x_ref, sum_ref, o_ref, *, inv_hw):
    mean = (sum_ref[...] * inv_hw).astype(o_ref.dtype)
    o_ref[...] = x_ref[...] - mean


# --------------------------------------------------------------------------- #
# Sizing helpers
# --------------------------------------------------------------------------- #
def _tpu_vmem_config():
    """(vmem_limit_bytes, target_block_bytes) sized per TPU generation."""
    phys = 64 * 1024 * 1024  # conservative default (v7x-class) if query fails
    try:
        info = pltpu.get_tpu_info()
        phys = int(getattr(info, "vmem_capacity_bytes", phys))
    except Exception:
        pass
    if phys <= 64 * 1024 * 1024:
        # v7x: 64 MiB physical / 32 MiB scoped default.  Stay well under the
        # part but use larger blocks (faster HBM -> per-step overhead matters).
        return 40 * 1024 * 1024, 6 * 1024 * 1024
    # v5e / v6e: 128 MiB physical.  Raise the 16/32 MiB scoped default so that
    # ~4 MiB double-buffered in+out blocks (~85% of HBM roofline) always fit.
    return 64 * 1024 * 1024, 4 * 1024 * 1024


def _sublane_multiple(itemsize):
    # 8 rows for 4-byte dtypes, 16 for bf16, 32 for 1-byte dtypes.
    return 8 * max(1, 4 // max(1, itemsize))


def _pick_row_tile(rows, row_bytes, target_block_bytes, sub):
    """Rows per block: big enough to amortize ~0.35us per-step overhead, small
    enough to fit the per-block VMEM target, and small enough to keep >= ~8 grid
    steps (DMA/compute overlap + both v7x cores) whenever rows permit."""
    by_vmem = max(1, target_block_bytes // max(1, row_bytes))
    by_pipe = max(1, (rows + 7) // 8)
    r = min(by_vmem, by_pipe)
    r = max(sub, (r // sub) * sub)
    return rows if r >= rows else r


# --------------------------------------------------------------------------- #
# Wrapper
# --------------------------------------------------------------------------- #
def my_bn_2(x, *, _force_hw_tiling=False, _hw_tile=None):
    """x: (N, C, H, W) -> x - mean over (H, W) per (N, C)."""
    N, C, H, W = x.shape
    rows, hw = N * C, H * W
    dt = x.dtype
    itemsize = jnp.dtype(dt).itemsize
    inv_hw = 1.0 / hw
    x2d = x.reshape(rows, hw)

    vmem_limit, target_block = _tpu_vmem_config()
    sub = _sublane_multiple(itemsize)

    # ---- path 3: hw-tiled fallback for very large spatial maps -------------- #
    min_block_bytes = sub * hw * itemsize
    if _force_hw_tiling or 4 * min_block_bytes > vmem_limit - (4 << 20):
        r_tile = rows if rows <= sub else sub
        hw_tile = _hw_tile or max(
            128, ((target_block // max(1, r_tile * itemsize)) // 128) * 128)
        hw_tile = min(hw_tile, hw)
        grid = (pl.cdiv(rows, r_tile), pl.cdiv(hw, hw_tile))

        sums = pl.pallas_call(
            functools.partial(_row_sum_kernel, hw=hw, hw_tile=hw_tile,
                              need_mask=(hw % hw_tile != 0)),
            out_shape=jax.ShapeDtypeStruct((rows, 1), jnp.float32),
            grid=grid,
            in_specs=[pl.BlockSpec((r_tile, hw_tile), lambda i, k: (i, k))],
            out_specs=pl.BlockSpec((r_tile, 1), lambda i, k: (i, 0)),
            compiler_params=pltpu.CompilerParams(
                dimension_semantics=("parallel", "arbitrary"),
                vmem_limit_bytes=vmem_limit),
        )(x2d)

        out2d = pl.pallas_call(
            functools.partial(_sub_bcast_kernel, inv_hw=inv_hw),
            out_shape=jax.ShapeDtypeStruct((rows, hw), dt),
            grid=grid,
            in_specs=[pl.BlockSpec((r_tile, hw_tile), lambda i, k: (i, k)),
                      pl.BlockSpec((r_tile, 1), lambda i, k: (i, 0))],
            out_specs=pl.BlockSpec((r_tile, hw_tile), lambda i, k: (i, k)),
            compiler_params=pltpu.CompilerParams(
                dimension_semantics=("parallel", "parallel"),
                vmem_limit_bytes=vmem_limit),
        )(x2d, sums)
        return out2d.reshape(N, C, H, W)

    # ---- path 2: lane-dense segmented path for small hw not % 128 ----------- #
    g = 128 // math.gcd(hw, 128)
    lane = g * hw
    use_seg = (
        hw % 128 != 0
        and jnp.issubdtype(dt, jnp.floating)
        and rows % g == 0
        and lane * itemsize <= 512 * 1024
        and (4 * lane * g * itemsize + 4 * sub * lane * itemsize
             <= vmem_limit - (4 << 20))
    )
    if use_seg:
        rows_g = rows // g
        x2g = x2d.reshape(rows_g, lane)            # free: merges trailing dims
        seg_ids = jnp.arange(lane, dtype=jnp.int32) // hw
        grp_ids = jnp.arange(g, dtype=jnp.int32)
        s_mat = (seg_ids[:, None] == grp_ids[None, :]).astype(dt)   # (lane, g)
        st_mat = (grp_ids[:, None] == seg_ids[None, :]).astype(dt)  # (g, lane)

        r_tile = _pick_row_tile(rows_g, lane * itemsize, target_block, sub)
        out2g = pl.pallas_call(
            functools.partial(_sub_mean_seg_kernel, inv_hw=inv_hw),
            out_shape=jax.ShapeDtypeStruct((rows_g, lane), dt),
            grid=(pl.cdiv(rows_g, r_tile),),
            in_specs=[pl.BlockSpec((r_tile, lane), lambda i: (i, 0)),
                      pl.BlockSpec((lane, g), lambda i: (0, 0)),
                      pl.BlockSpec((g, lane), lambda i: (0, 0))],
            out_specs=pl.BlockSpec((r_tile, lane), lambda i: (i, 0)),
            compiler_params=pltpu.CompilerParams(
                dimension_semantics=("parallel",),
                vmem_limit_bytes=vmem_limit),
        )(x2g, s_mat, st_mat)
        return out2g.reshape(N, C, H, W)

    # ---- path 1: standard lane-dense spatial reduction ---------------------- #
    # TODO(synk): if hw % 128 != 0 and the segmented path is not applicable
    # (rows % G != 0 or non-float dtype), stores fall back to masked vst.
    r_tile = _pick_row_tile(rows, hw * itemsize, target_block, sub)
    out2d = pl.pallas_call(
        functools.partial(_sub_mean_kernel, inv_hw=inv_hw),
        out_shape=jax.ShapeDtypeStruct((rows, hw), dt),
        grid=(pl.cdiv(rows, r_tile),),
        in_specs=[pl.BlockSpec((r_tile, hw), lambda i: (i, 0))],
        out_specs=pl.BlockSpec((r_tile, hw), lambda i: (i, 0)),
        compiler_params=pltpu.CompilerParams(
            dimension_semantics=("parallel",),
            vmem_limit_bytes=vmem_limit),
        cost_estimate=pl.CostEstimate(
            flops=2 * rows * hw, transcendentals=0,
            bytes_accessed=2 * rows * hw * itemsize),
    )(x2d)
    return out2d.reshape(N, C, H, W)


# --------------------------------------------------------------------------- #
# Self-test
# --------------------------------------------------------------------------- #
if __name__ == "__main__":
    key = jax.random.PRNGKey(0)
    k1, k2, k3, k4 = jax.random.split(key, 4)

    def ref_fn(x):
        return x - jnp.mean(x, axis=(2, 3), keepdims=True)

    cases = [
        # 1) required shape: hw = 256 (multiple of 128) -> standard path
        ("std_16x16", jax.random.normal(k1, (2, 4, 16, 16), jnp.float32), {}),
        # 2) hw = 49 (not a multiple of 128), rows % 128 == 0 -> segmented path
        ("seg_7x7", jax.random.normal(k2, (2, 128, 7, 7), jnp.float32), {}),
        # 3) rows not a multiple of the row tile (masked edge) + multi-step grid
        ("edge_rows", jax.random.normal(k3, (4, 31, 16, 16), jnp.float32), {}),
        # 4) hw-tiled fallback (forced so it runs at a small shape, incl. mask)
        ("hw_tiled", jax.random.normal(k4, (2, 4, 30, 30), jnp.float32),
         {"_force_hw_tiling": True, "_hw_tile": 256}),
    ]

    for name, x, kw in cases:
        out = my_bn_2(x, **kw)
        jax.block_until_ready(out)
        ref = ref_fn(x)
        assert out.shape == x.shape and out.dtype == x.dtype, name
        assert jnp.allclose(out, ref, atol=1e-5, rtol=1e-5), (
            f"mismatch vs reference: {name}")

    print("KERNEL_OK")
</pallas_src>

<mosaic_0001>
module attributes {stable_mosaic.version = 11 : i64} {
  func.func @_sub_mean_kernel(%arg0: i32, %arg1: memref<8x256xf32, #tpu.memory_space<vmem>>, %arg2: memref<8x256xf32, #tpu.memory_space<vmem>>) attributes {dimension_semantics = [#tpu.dimension_semantics<parallel>], iteration_bounds = array<i64: 1>, scalar_prefetch = 0 : i64, scratch_operands = 0 : i64, tpu.core_type = #tpu.core_type<tc>, window_params = [{transform_indices = @transform_0, window_bounds = array<i64: 8, 256>}, {transform_indices = @transform_1, window_bounds = array<i64: 8, 256>}]} {
    %c0 = arith.constant 0 : index
    %c0_0 = arith.constant 0 : index
    %0 = vector.load %arg1[%c0, %c0_0] : memref<8x256xf32, #tpu.memory_space<vmem>>, vector<8x256xf32>
    %cst = arith.constant dense<0.000000e+00> : vector<8xf32>
    %1 = vector.multi_reduction <add>, %0, %cst [1] : vector<8x256xf32> to vector<8xf32>
    %2 = vector.shape_cast %1 : vector<8xf32> to vector<8x1xf32>
    %cst_1 = arith.constant 3.906250e-03 : f32
    %3 = vector.broadcast %cst_1 : f32 to vector<8x1xf32>
    %4 = arith.mulf %2, %3 : vector<8x1xf32>
    %c0_2 = arith.constant 0 : index
    %c0_3 = arith.constant 0 : index
    %5 = vector.load %arg1[%c0_2, %c0_3] : memref<8x256xf32, #tpu.memory_space<vmem>>, vector<8x256xf32>
    %6 = vector.broadcast %4 : vector<8x1xf32> to vector<8x256xf32>
    %7 = arith.subf %5, %6 : vector<8x256xf32>
    %c0_4 = arith.constant 0 : index
    %c0_5 = arith.constant 0 : index
    %8 = vector.load %arg2[%c0_4, %c0_5] : memref<8x256xf32, #tpu.memory_space<vmem>>, vector<8x256xf32>
    tpu.vector_store %arg2[%c0_4, %c0_5], %7 {strides = array<i32>} : memref<8x256xf32, #tpu.memory_space<vmem>>, vector<8x256xf32>,
    return
  }
  func.func @transform_0(%arg0: i32) -> (i32, i32) {
    %c0_i32 = arith.constant 0 : i32
    %c0_i32_0 = arith.constant 0 : i32
    return %arg0, %c0_i32 : i32, i32
  }
  func.func @transform_1(%arg0: i32) -> (i32, i32) {
    %c0_i32 = arith.constant 0 : i32
    %c0_i32_0 = arith.constant 0 : i32
    return %arg0, %c0_i32 : i32, i32
  }
}

</mosaic_0001>

<llo_original>
// kernel: tpu_custom_call.1
$region0: #{tpu_custom_call.1}
  #allocation0 [shape = 'u32[]', space=smem, size = 0x4, offset = 0x4, fixed_abs, tag = 'smem constant byte address 0x4 - core index']
  #allocation1 [shape = 'u32[144,128]{1,0:T(1,128)}', space=vmem, size = 0x12000, scoped, tag = 'internal scratch']
  %s0 = inlined_call_operand.hbm [shape: f32[8,256], index: 0, kind: input, shape index: {}]
  %s1 = inlined_call_operand.hbm [shape: f32[8,256], index: 1, kind: output, shape index: {}]
  %s2 = sld [smem:[#allocation0]]
  $region18: #{tpu_custom_call.1} parent=0
    _
  %s4 = ssub.s32 1, %s2
  %s5 = scalar_select 0, %s4, %s2
  $region1: #{tpu_custom_call.1} parent=0
    #allocation2 [shape = 'u8[8192]{0}', space=vmem, size = 0x2000, scoped, tag = 'input window, operand 0, single buffered']
    #allocation3 [shape = 's32[1]{0}', space=sflag, size = 0x4, scoped, tag = 'scoped memory for tpu_custom_call.1']
    #allocation4 [shape = 's32[1]{0}', space=sflag, size = 0x4, scoped, tag = 'scoped memory for tpu_custom_call.1']
    #allocation5 [shape = 'u8[8192]{0}', space=vmem, size = 0x2000, scoped, tag = 'output window, operand 0, single buffered']
    %6 = vsyncpa [#allocation3], 0
    %7 = vsyncpa [#allocation4], 0
    // Predicated region
    $region2: #{tpu_custom_call.1} parent=1 // pred_check
      _
    $region3: #{tpu_custom_call.1} parent=1 // pred_check_branch
      %9 = sbr.rel (0) target = $region5
    $region4: #{tpu_custom_call.1} parent=1 // pred_region
      %s11 = ssub.s32 256, 256
      %12 = vsyncadd [#allocation3], %s11
      %s14 = sshll.u32 [#allocation2], 4
      %s15 = int_to_ptr.vmem [resolvable:$true] %s14
      %17 = dma.hbm_to_vmem [thread:$0]  %s0, 256, %s15, [#allocation3]
    $region5: #{tpu_custom_call.1} parent=1 // pred_fallthru
      _
    // Predicated region
    $region6: #{tpu_custom_call.1} parent=1 // pred_check
      _
    $region7: #{tpu_custom_call.1} parent=1 // pred_check_branch
      %19 = sbr.rel (0) target = $region9
    $region8: #{tpu_custom_call.1} parent=1 // pred_region
      %20 = dma.done [#allocation3], 256
    $region9: #{tpu_custom_call.1} parent=1 // pred_fallthru
      _
    %v21 = vld [vmem:[#allocation2] sm:$0xff]
    %v22 = vld [vmem:[#allocation2 + $0x8] sm:$0xff]
    %v23 = vadd.f32 %v21, %v22
    %24 = vadd.xlane.f32.xlu0 %v23
    %v25 = vpop.xlane.xlu0 %24
    %v26 = vmul.f32 %v25, 0.00390625
    %v27 = vsub.f32 %v21, %v26
    %v28 = vsub.f32 %v22, %v26
    %29 = vst [vmem:[#allocation5] sm:$0xff] %v27
    %30 = vst [vmem:[#allocation5 + $0x8] sm:$0xff] %v28
    // Predicated region
    $region10: #{tpu_custom_call.1} parent=1 // pred_check
      _
    $region11: #{tpu_custom_call.1} parent=1 // pred_check_branch
      %32 = sbr.rel (0) target = $region13
    $region12: #{tpu_custom_call.1} parent=1 // pred_region
      %s34 = ssub.s32 256, 256
      %35 = vsyncadd [#allocation4], %s34
      %s37 = sshll.u32 [#allocation5], 4
      %s38 = int_to_ptr.vmem [resolvable:$true] %s37
      %40 = dma.vmem_to_hbm [thread:$0]  %s38, 256, %s1, [#allocation4]
    $region13: #{tpu_custom_call.1} parent=1 // pred_fallthru
      _
    // Predicated region
    $region14: #{tpu_custom_call.1} parent=1 // pred_check
      _
    $region15: #{tpu_custom_call.1} parent=1 // pred_check_branch
      %42 = sbr.rel (0) target = $region17
    $region16: #{tpu_custom_call.1} parent=1 // pred_region
      %43 = dma.done [#allocation4], 256
    $region17: #{tpu_custom_call.1} parent=1 // pred_fallthru
      _
    %44 = vsyncpa [#allocation3], 1
    %45 = vsyncpa [#allocation4], 1

</llo_original>
